<compile_context>
chip_gen: v6e
topology: v6e:2x2x1
jax: 0.10.0
libtpu: 0.0.40
codegen_flags: <defaults>
</compile_context>

<pallas_src>
import math

import jax
import jax.numpy as jnp
from jax.experimental import pallas as pl
from jax.experimental.pallas import tpu as pltpu


def spo_forward_kernel(x_ref, w_ref, b_ref, cost_ref, action_ref):
    """Fused predict (linear) + optimization oracle (argmin one-hot) on one batch tile."""
    x = x_ref[...]                      # (TB, F)
    w = w_ref[...]                      # (F, Cp)  -- VMEM-resident across the grid
    b = b_ref[...]                      # (1, Cp)

    # Hot path 1: cost prediction (MXU matmul, f32 accumulate).
    cost = jnp.dot(x, w, preferred_element_type=jnp.float32) + b   # (TB, Cp)
    cost_ref[...] = cost

    # Hot path 2: optimization oracle  argmin_c cost[b, c]  -> one-hot action.
    # Tie-break on the first (lowest-index) minimizer, matching torch.argmin.
    cp = cost.shape[1]
    min_val = jnp.min(cost, axis=-1, keepdims=True)                 # XLU reduce
    col = jax.lax.broadcasted_iota(jnp.int32, cost.shape, 1)        # (TB, Cp)
    first_idx = jnp.min(jnp.where(cost == min_val, col, cp),
                        axis=-1, keepdims=True)
    action_ref[...] = (col == first_idx).astype(jnp.float32)


def _round_up(x, m):
    return (x + m - 1) // m * m


def spo_forward(features, weight, bias, *, tb=512):
    """One pallas_call, batch-tiled, lane-dense (C padded to 128) outputs.

    features: (B, F) f32     weight: (F, C) f32     bias: (1, C) f32
    Returns (cost_pred (B, C), action_pred (B, C) one-hot, caches dict).
    """
    B, F = features.shape
    C = weight.shape[1]
    LANE = 128

    # Lane-dense output width; padded cost lanes are forced huge so they never
    # win the argmin.
    Cp = _round_up(C, LANE)
    # Batch tile: multiple of 8 (sublane constraint), capped at `tb`.
    TB = min(tb, _round_up(B, 8))
    Bp = _round_up(B, TB)

    x_p = features if Bp == B else jnp.pad(features, ((0, Bp - B), (0, 0)))
    if Cp == C:
        w_p, b_p = weight, bias
    else:
        big = float(jnp.finfo(jnp.float32).max)
        w_p = jnp.pad(weight, ((0, 0), (0, Cp - C)))
        b_p = jnp.pad(bias, ((0, 0), (0, Cp - C)), constant_values=big)

    grid = (Bp // TB,)

    cost_est = pl.CostEstimate(
        flops=2 * Bp * F * Cp,
        transcendentals=0,
        bytes_accessed=4 * (Bp * F + F * Cp + Cp + 2 * Bp * Cp),
    )

    cost_p, action_p = pl.pallas_call(
        spo_forward_kernel,
        out_shape=(
            jax.ShapeDtypeStruct((Bp, Cp), jnp.float32),  # cost_pred (padded)
            jax.ShapeDtypeStruct((Bp, Cp), jnp.float32),  # action_pred (padded)
        ),
        grid=grid,
        in_specs=[
            pl.BlockSpec((TB, F), lambda i: (i, 0)),   # feature tile (pipelined)
            pl.BlockSpec((F, Cp), lambda i: (0, 0)),   # weight, VMEM-resident
            pl.BlockSpec((1, Cp), lambda i: (0, 0)),   # bias, VMEM-resident
        ],
        out_specs=(
            pl.BlockSpec((TB, Cp), lambda i: (i, 0)),
            pl.BlockSpec((TB, Cp), lambda i: (i, 0)),
        ),
        compiler_params=pltpu.CompilerParams(
            dimension_semantics=("parallel",),       # shard batch tiles across TCs (v7x)
            vmem_limit_bytes=32 * 1024 * 1024,       # fits v7x's smaller VMEM with headroom
        ),
        cost_estimate=cost_est,
    )(x_p, w_p, b_p)

    cost_pred = cost_p[:B, :C]
    action_pred = action_p[:B, :C]
    # caches (predict_cache / oracle_cache) are None in the require_grad=False path
    return cost_pred, action_pred, {"predict_cache": None, "oracle_cache": None}


def xavier_uniform(key, fan_in, fan_out, dtype=jnp.float32):
    # matches nn.init.xavier_uniform_ (gain=1) for a Linear weight (fan_out, fan_in),
    # returned transposed as (fan_in, fan_out) for the x @ W layout.
    bound = math.sqrt(6.0 / (fan_in + fan_out))
    w = jax.random.uniform(key, (fan_out, fan_in), dtype, -bound, bound)
    return w.T


def _reference(features, weight, bias, dim_cost):
    cost = features @ weight + bias
    action = jax.nn.one_hot(jnp.argmin(cost, axis=-1), dim_cost, dtype=jnp.float32)
    return cost, action


# TODO(synk): training-loop glue (update/loss_func/optimizer/backward hooks,
# batch_loader) is host-side framework code with injected callables; it has no
# Pallas equivalent and is intentionally not ported.

if __name__ == "__main__":
    key = jax.random.PRNGKey(0)
    k_feat, k_w, k_b, k_feat2 = jax.random.split(key, 4)

    n_features = 32   # params['n_features']
    dim_cost = 16     # params['dim_cost']

    weight = xavier_uniform(k_w, n_features, dim_cost)                  # (F, C)
    bias = jax.random.normal(k_b, (1, dim_cost), jnp.float32) * 0.01    # (1, C)

    # Case 1: tiny batch (grid of 1 tile).
    batch = 8
    features = jax.random.normal(k_feat, (batch, n_features), jnp.float32)
    cost_pred, action_pred, cache = spo_forward(features, weight, bias)
    jax.block_until_ready((cost_pred, action_pred))

    cost_ref, action_ref = _reference(features, weight, bias, dim_cost)
    assert cost_pred.shape == (batch, dim_cost)
    assert jnp.allclose(cost_pred, cost_ref, atol=1e-5), "cost mismatch (B=8)"
    assert jnp.allclose(action_pred, action_ref), "action mismatch (B=8)"

    # Case 2: larger batch with a small tile to exercise the batch-tiled grid.
    batch2 = 64
    features2 = jax.random.normal(k_feat2, (batch2, n_features), jnp.float32)
    cost_pred2, action_pred2, _ = spo_forward(features2, weight, bias, tb=16)  # grid=(4,)
    jax.block_until_ready((cost_pred2, action_pred2))

    cost_ref2, action_ref2 = _reference(features2, weight, bias, dim_cost)
    assert jnp.allclose(cost_pred2, cost_ref2, atol=1e-5), "cost mismatch (B=64)"
    assert jnp.allclose(action_pred2, action_ref2), "action mismatch (B=64)"

    print("KERNEL_OK")
</pallas_src>

<mosaic_0001>
module attributes {stable_mosaic.version = 11 : i64} {
  func.func @spo_forward_kernel(%arg0: i32, %arg1: memref<8x32xf32, #tpu.memory_space<vmem>>, %arg2: memref<32x128xf32, #tpu.memory_space<vmem>>, %arg3: memref<1x128xf32, #tpu.memory_space<vmem>>, %arg4: memref<8x128xf32, #tpu.memory_space<vmem>>, %arg5: memref<8x128xf32, #tpu.memory_space<vmem>>) attributes {dimension_semantics = [#tpu.dimension_semantics<parallel>], iteration_bounds = array<i64: 1>, scalar_prefetch = 0 : i64, scratch_operands = 0 : i64, tpu.core_type = #tpu.core_type<tc>, window_params = [{transform_indices = @transform_0, window_bounds = array<i64: 8, 32>}, {pipeline_mode = #tpu.pipeline_mode<synchronous>, transform_indices = @transform_1, window_bounds = array<i64: 32, 128>}, {pipeline_mode = #tpu.pipeline_mode<synchronous>, transform_indices = @transform_2, window_bounds = array<i64: 1, 128>}, {transform_indices = @transform_3, window_bounds = array<i64: 8, 128>}, {transform_indices = @transform_4, window_bounds = array<i64: 8, 128>}]} {
    %c0 = arith.constant 0 : index
    %c0_0 = arith.constant 0 : index
    %0 = vector.load %arg1[%c0, %c0_0] : memref<8x32xf32, #tpu.memory_space<vmem>>, vector<8x32xf32>
    %c0_1 = arith.constant 0 : index
    %c0_2 = arith.constant 0 : index
    %1 = vector.load %arg2[%c0_1, %c0_2] : memref<32x128xf32, #tpu.memory_space<vmem>>, vector<32x128xf32>
    %c0_3 = arith.constant 0 : index
    %c0_4 = arith.constant 0 : index
    %2 = vector.load %arg3[%c0_3, %c0_4] : memref<1x128xf32, #tpu.memory_space<vmem>>, vector<1x128xf32>
    %cst = arith.constant dense<0.000000e+00> : vector<8x128xf32>
    %3 = tpu.matmul %0, %1, %cst {dimension_numbers = #tpu.dot_dimension_numbers<[1], [0], [0], [1], [0, 0, 1, 1], [], []>} : vector<8x32xf32>, vector<32x128xf32>, vector<8x128xf32> -> vector<8x128xf32>
    %4 = vector.broadcast %2 : vector<1x128xf32> to vector<8x128xf32>
    %5 = arith.addf %3, %4 : vector<8x128xf32>
    %c0_5 = arith.constant 0 : index
    %c0_6 = arith.constant 0 : index
    %6 = vector.load %arg4[%c0_5, %c0_6] : memref<8x128xf32, #tpu.memory_space<vmem>>, vector<8x128xf32>
    tpu.vector_store %arg4[%c0_5, %c0_6], %5 {strides = array<i32>} : memref<8x128xf32, #tpu.memory_space<vmem>>, vector<8x128xf32>,
    %cst_7 = arith.constant dense<0x7F800000> : vector<8xf32>
    %7 = vector.multi_reduction <minimumf>, %5, %cst_7 [1] : vector<8x128xf32> to vector<8xf32>
    %8 = vector.shape_cast %7 : vector<8xf32> to vector<8x1xf32>
    %9 = tpu.iota {dimensions = array<i32: 1>} : vector<8x128xi32>
    %10 = vector.broadcast %8 : vector<8x1xf32> to vector<8x128xf32>
    %11 = arith.cmpf oeq, %5, %10 : vector<8x128xf32>
    %c128_i32 = arith.constant 128 : i32
    %12 = vector.broadcast %c128_i32 : i32 to vector<8x128xi32>
    %13 = arith.select %11, %9, %12 : vector<8x128xi1>, vector<8x128xi32>
    %cst_8 = arith.constant dense<2147483647> : vector<8xi32>
    %14 = vector.multi_reduction <minsi>, %13, %cst_8 [1] : vector<8x128xi32> to vector<8xi32>
    %15 = vector.shape_cast %14 : vector<8xi32> to vector<8x1xi32>
    %16 = vector.broadcast %15 : vector<8x1xi32> to vector<8x128xi32>
    %17 = arith.cmpi eq, %9, %16 : vector<8x128xi32>
    %18 = arith.extui %17 : vector<8x128xi1> to vector<8x128xi32>
    %19 = arith.sitofp %18 : vector<8x128xi32> to vector<8x128xf32>
    %c0_9 = arith.constant 0 : index
    %c0_10 = arith.constant 0 : index
    %20 = vector.load %arg5[%c0_9, %c0_10] : memref<8x128xf32, #tpu.memory_space<vmem>>, vector<8x128xf32>
    tpu.vector_store %arg5[%c0_9, %c0_10], %19 {strides = array<i32>} : memref<8x128xf32, #tpu.memory_space<vmem>>, vector<8x128xf32>,
    return
  }
  func.func @transform_0(%arg0: i32) -> (i32, i32) {
    %c0_i32 = arith.constant 0 : i32
    %c0_i32_0 = arith.constant 0 : i32
    return %arg0, %c0_i32 : i32, i32
  }
  func.func @transform_1(%arg0: i32) -> (i32, i32) {
    %c0_i32 = arith.constant 0 : i32
    %c0_i32_0 = arith.constant 0 : i32
    %c0_i32_1 = arith.constant 0 : i32
    return %c0_i32, %c0_i32_0 : i32, i32
  }
  func.func @transform_2(%arg0: i32) -> (i32, i32) {
    %c0_i32 = arith.constant 0 : i32
    %c0_i32_0 = arith.constant 0 : i32
    %c0_i32_1 = arith.constant 0 : i32
    return %c0_i32, %c0_i32_0 : i32, i32
  }
  func.func @transform_3(%arg0: i32) -> (i32, i32) {
    %c0_i32 = arith.constant 0 : i32
    %c0_i32_0 = arith.constant 0 : i32
    return %arg0, %c0_i32 : i32, i32
  }
  func.func @transform_4(%arg0: i32) -> (i32, i32) {
    %c0_i32 = arith.constant 0 : i32
    %c0_i32_0 = arith.constant 0 : i32
    return %arg0, %c0_i32 : i32, i32
  }
}

</mosaic_0001>

<llo_original>
// kernel: tpu_custom_call.1
$region0: #{tpu_custom_call.1}
  #allocation0 [shape = 'u32[]', space=smem, size = 0x4, offset = 0x4, fixed_abs, tag = 'smem constant byte address 0x4 - core index']
  #allocation1 [shape = 'u32[144,128]{1,0:T(1,128)}', space=vmem, size = 0x12000, scoped, tag = 'internal scratch']
  %s0 = inlined_call_operand.hbm [shape: f32[8,32], index: 0, kind: input, shape index: {}]
  %s1 = inlined_call_operand.hbm [shape: f32[32,128], index: 1, kind: input, shape index: {}]
  %s2 = inlined_call_operand.vmem [shape: f32[1,128], index: 2, kind: input, shape index: {}]
  %s3 = inlined_call_operand.hbm [shape: f32[8,128], index: 3, kind: output, shape index: {0}]
  %s4 = inlined_call_operand.hbm [shape: f32[8,128], index: 4, kind: output, shape index: {1}]
  %5 = xla_tuple %s3, %s4
  %s6 = sld [smem:[#allocation0]]
  $region38: #{tpu_custom_call.1} parent=0
    _
  %s8 = ssub.s32 1, %s6
  %s9 = scalar_select 0, %s8, %s6
  $region1: #{tpu_custom_call.1} parent=0
    #allocation2 [shape = 'u8[4096]{0}', space=vmem, size = 0x1000, scoped, tag = 'input window, operand 0, single buffered']
    #allocation3 [shape = 's32[1]{0}', space=sflag, size = 0x4, scoped, tag = 'scoped memory for tpu_custom_call.1']
    #allocation4 [shape = 's32[1]{0}', space=sflag, size = 0x4, scoped, tag = 'scoped memory for tpu_custom_call.1']
    #allocation5 [shape = 'u8[16384]{0}', space=vmem, size = 0x4000, scoped, tag = 'input window, operand 1, single buffered']
    #allocation6 [shape = 's32[1]{0}', space=sflag, size = 0x4, scoped, tag = 'scoped memory for tpu_custom_call.1']
    #allocation7 [shape = 'u8[4096]{0}', space=vmem, size = 0x1000, scoped, tag = 'output window, operand 0, single buffered']
    #allocation8 [shape = 'u8[4096]{0}', space=vmem, size = 0x1000, scoped, tag = 'output window, operand 1, single buffered']
    #allocation9 [shape = 's32[1]{0}', space=sflag, size = 0x4, scoped, tag = 'scoped memory for tpu_custom_call.1']
    %10 = vsyncpa [#allocation3], 0
    %11 = vsyncpa [#allocation6], 0
    %12 = vsyncpa [#allocation4], 0
    %13 = vsyncpa [#allocation9], 0
    // Predicated region
    $region2: #{tpu_custom_call.1} parent=1 // pred_check
      _
    $region3: #{tpu_custom_call.1} parent=1 // pred_check_branch
      %15 = sbr.rel (0) target = $region5
    $region4: #{tpu_custom_call.1} parent=1 // pred_region
      %s17 = ssub.s32 128, 128
      %18 = vsyncadd [#allocation3], %s17
      %s20 = sshll.u32 [#allocation2], 4
      %s21 = int_to_ptr.vmem [resolvable:$true] %s20
      %23 = dma.hbm_to_vmem [thread:$0]  %s0, 128, %s21, [#allocation3]
    $region5: #{tpu_custom_call.1} parent=1 // pred_fallthru
      _
    // Predicated region
    $region6: #{tpu_custom_call.1} parent=1 // pred_check
      _
    $region7: #{tpu_custom_call.1} parent=1 // pred_check_branch
      %25 = sbr.rel (0) target = $region9
    $region8: #{tpu_custom_call.1} parent=1 // pred_region
      %s27 = ssub.s32 512, 512
      %28 = vsyncadd [#allocation6], %s27
      %s29 = sshll.u32 [#allocation5], 4
      %s30 = int_to_ptr.vmem [resolvable:$true] %s29
      %35 = dma.hbm_to_vmem [thread:$0]  %s1, 512, %s30, [#allocation6], 128, 128, 8
    $region9: #{tpu_custom_call.1} parent=1 // pred_fallthru
      _
    // Predicated region
    $region10: #{tpu_custom_call.1} parent=1 // pred_check
      _
    $region11: #{tpu_custom_call.1} parent=1 // pred_check_branch
      %37 = sbr.rel (0) target = $region13
    $region12: #{tpu_custom_call.1} parent=1 // pred_region
      _
    $region13: #{tpu_custom_call.1} parent=1 // pred_fallthru
      _
    // Predicated region
    $region14: #{tpu_custom_call.1} parent=1 // pred_check
      _
    $region15: #{tpu_custom_call.1} parent=1 // pred_check_branch
      %39 = sbr.rel (0) target = $region17
    $region16: #{tpu_custom_call.1} parent=1 // pred_region
      %40 = dma.done [#allocation3], 128
    $region17: #{tpu_custom_call.1} parent=1 // pred_fallthru
      _
    // Predicated region
    $region18: #{tpu_custom_call.1} parent=1 // pred_check
      _
    $region19: #{tpu_custom_call.1} parent=1 // pred_check_branch
      %42 = sbr.rel (0) target = $region21
    $region20: #{tpu_custom_call.1} parent=1 // pred_region
      %43 = dma.done [#allocation6], 512
    $region21: #{tpu_custom_call.1} parent=1 // pred_fallthru
      _
    %v44 = vld [vmem:[#allocation2] sm:$0xff]
    %v45 = vld [vmem:[#allocation5] sm:$0xff]
    %v46 = vld [vmem:[#allocation5 + $0x8] sm:$0xff]
    %v47 = vld [vmem:[#allocation5 + $0x10] sm:$0xff]
    %v48 = vld [vmem:[#allocation5 + $0x18] sm:$0xff]
    %v49 = vld [vmem:[%s2] sm:$0x1]
    %v51 = vlaneseq
    %v52 = vshrl.u32 %v51, 7
    %v53 = vsub.s32 0, %v52
    %v54 = vrot.slane %v49, %v53
    %vm56 = vcmask 261120
    %v58 = vsel %vm56, %v44, 0
    %60 = vmatprep.subr.mxu0 0.0
    %61 = vmatpush1.msra.mxu0 0.0
    %62 = vmatprep.subr.mxu0 0.0
    %63 = vmatpush1.msra.mxu0 0.0
    %64 = vmatprep.subr.mxu0 0.0
    %65 = vmatpush1.msra.mxu0 0.0
    %66 = vmatprep.subr.mxu0 0.0
    %67 = vmatpush1.msra.mxu0 0.0
    %68 = vmatprep.subr.mxu0 0.0
    %69 = vmatpush1.msra.mxu0 0.0
    %70 = vmatprep.subr.mxu0 0.0
    %71 = vmatpush1.msra.mxu0 0.0
    %72 = vmatprep.subr.mxu0 0.0
    %73 = vmatpush1.msra.mxu0 0.0
    %74 = vmatprep.subr.mxu0 0.0
    %75 = vmatpush1.msra.mxu0 0.0
    %76 = vmatprep.subr.mxu0 0.0
    %77 = vmatpush1.msra.mxu0 0.0
    %78 = vmatprep.subr.mxu0 0.0
    %79 = vmatpush1.msra.mxu0 0.0
    %80 = vmatprep.subr.mxu0 0.0
    %81 = vmatpush1.msra.mxu0 0.0
    %82 = vmatprep.subr.mxu0 0.0
    %83 = vmatpush1.msra.mxu0 0.0
    %84 = vmatprep.subr.mxu0 0.0
    %85 = vmatpush1.msra.mxu0 %v48
    %86 = vmatprep.subr.mxu0 0.0
    %87 = vmatpush1.msra.mxu0 %v47
    %88 = vmatprep.subr.mxu0 0.0
    %89 = vmatpush1.msra.mxu0 %v46
    %90 = vmatprep.subr.mxu0 0.0
    %91 = vmatpush1.msra.mxu0 %v45
    %92 = vmatprep.subr.mxu0 0.0
    %93 = vmatpush2.msra.mxu0 0.0
    %94 = vmatprep.subr.mxu0 0.0
    %95 = vmatpush2.msra.mxu0 0.0
    %96 = vmatprep.subr.mxu0 0.0
    %97 = vmatpush2.msra.mxu0 0.0
    %98 = vmatprep.subr.mxu0 0.0
    %99 = vmatpush2.msra.mxu0 0.0
    %100 = vmatprep.subr.mxu0 0.0
    %101 = vmatpush2.msra.mxu0 0.0
    %102 = vmatprep.subr.mxu0 0.0
    %103 = vmatpush2.msra.mxu0 0.0
    %104 = vmatprep.subr.mxu0 0.0
    %105 = vmatpush2.msra.mxu0 0.0
    %106 = vmatprep.subr.mxu0 0.0
    %107 = vmatpush2.msra.mxu0 0.0
    %108 = vmatprep.subr.mxu0 0.0
    %109 = vmatpush2.msra.mxu0 0.0
    %110 = vmatprep.subr.mxu0 0.0
    %111 = vmatpush2.msra.mxu0 0.0
    %112 = vmatprep.subr.mxu0 0.0
    %113 = vmatpush2.msra.mxu0 0.0
    %114 = vmatprep.subr.mxu0 0.0
    %115 = vmatpush2.msra.mxu0 0.0
    %116 = vmatprep.subr.mxu0 0.0
    %117 = vmatpush2.msra.mxu0 0.0
    %118 = vmatprep.subr.mxu0 0.0
    %119 = vmatpush2.msra.mxu0 0.0
    %120 = vmatprep.subr.mxu0 0.0
    %121 = vmatpush2.msra.mxu0 0.0
    %122 = vmatprep.subr.mxu0 0.0
    %123 = vmatpush2.msra.mxu0 0.0
    %124 = vmatprep.mubr.f32.mxu0 0.0
    %125 = vmatmul.mubr.f32.gmra.mxu0 %v58
    %v126 = vpop.f32.mrf.mxu0
    %v127 = vadd.f32 %v54, %v126
    %v128 = vpop.f32.mrf.mxu0
    %129 = vdwg.mxu0
    %130 = vst [vmem:[#allocation7] sm:$0xff] %v127
    %131 = vmin.xlane.f32.xlu0 %v127
    %v132 = vpop.xlane.xlu0 %131
    %v133 = vlaneseq
    %v134 = vand.u32 %v133, 127
    %vm135 = vcmp.eq.f32.partialorder %v127, %v132
    %v136 = vsel %vm135, %v134, 128
    %v137 = vand.u32 %v136, 65535
    %v138 = vshra.s32 %v136, 16
    %v139 = vcvt.s32.f32 %v137
    %v140 = vcvt.s32.f32 %v138
    %141 = vmin.xlane.f32.xlu0 %v140
    %v142 = vpop.xlane.xlu0 %141
    %vm143 = vcmp.eq.f32.partialorder %v140, %v142
    %v144 = vsel %vm143, %v139, inf
    %145 = vmin.xlane.f32.xlu0 %v144
    %v146 = vpop.xlane.xlu0 %145
    %v147 = vcvt.f32.s32 %v146
    %v148 = vcvt.f32.s32 %v142
    %v149 = vshll.u32 %v148, 16
    %v150 = vadd.s32 %v149, %v147
    %vm151 = vcmp.eq.s32.totalorder %v134, %v150
    %v152 = vsel %vm151, 1, 0
    %v153 = vcvt.s32.f32 %v152
    %154 = vst [vmem:[#allocation8] sm:$0xff] %v153
    // Predicated region
    $region22: #{tpu_custom_call.1} parent=1 // pred_check
      _
    $region23: #{tpu_custom_call.1} parent=1 // pred_check_branch
      %156 = sbr.rel (0) target = $region25
    $region24: #{tpu_custom_call.1} parent=1 // pred_region
      %s158 = ssub.s32 128, 128
      %159 = vsyncadd [#allocation4], %s158
      %s161 = sshll.u32 [#allocation7], 4
      %s162 = int_to_ptr.vmem [resolvable:$true] %s161
      %164 = dma.vmem_to_hbm [thread:$0]  %s162, 128, %s3, [#allocation4]
    $region25: #{tpu_custom_call.1} parent=1 // pred_fallthru
      _
    // Predicated region
    $region26: #{tpu_custom_call.1} parent=1 // pred_check
      _
    $region27: #{tpu_custom_call.1} parent=1 // pred_check_branch
      %166 = sbr.rel (0) target = $region29
    $region28: #{tpu_custom_call.1} parent=1 // pred_region
      %s168 = ssub.s32 128, 128
      %169 = vsyncadd [#allocation9], %s168
      %s171 = sshll.u32 [#allocation8], 4
      %s172 = int_to_ptr.vmem [resolvable:$true] %s171
      %174 = dma.vmem_to_hbm [thread:$0]  %s172, 128, %s4, [#allocation9]
    $region29: #{tpu_custom_call.1} parent=1 // pred_fallthru
      _
    // Predicated region
    $region30: #{tpu_custom_call.1} parent=1 // pred_check
      _
    $region31: #{tpu_custom_call.1} parent=1 // pred_check_branch
      %176 = sbr.rel (0) target = $region33
    $region32: #{tpu_custom_call.1} parent=1 // pred_region
      %177 = dma.done [#allocation4], 128
    $region33: #{tpu_custom_call.1} parent=1 // pred_fallthru
      _
    // Predicated region
    $region34: #{tpu_custom_call.1} parent=1 // pred_check
      _
    $region35: #{tpu_custom_call.1} parent=1 // pred_check_branch
      %179 = sbr.rel (0) target = $region37
    $region36: #{tpu_custom_call.1} parent=1 // pred_region
      %180 = dma.done [#allocation9], 128
    $region37: #{tpu_custom_call.1} parent=1 // pred_fallthru
      _
    %181 = vsyncpa [#allocation3], 1
    %182 = vsyncpa [#allocation6], 1
    %183 = vsyncpa [#allocation4], 1
    %184 = vsyncpa [#allocation9], 1

</llo_original>
